<compile_context>
chip_gen: v5e
topology: v5e:2x2
jax: 0.10.0
libtpu: 0.0.40
codegen_flags: <defaults>
</compile_context>

<pallas_src>
import jax
import jax.numpy as jnp
from jax.experimental import pallas as pl
from jax.experimental.pallas import tpu as pltpu


# (in_features, out_features) per layer, matching the PyTorch module.
DIMS = [(784, 256), (256, 128), (128, 64), (64, 10)]

# Default batch tile; sized so even on v7x (64 MiB VMEM, 32 MiB scoped default)
# the double-buffered bf16 x tiles (~1.6 MB), bf16 weights (~0.5 MB) and fp32
# intermediates (~2 MB) fit with lots of headroom.
DEFAULT_TILE_B = 512


def _mlp_kernel(x_ref,
                w1_ref, b1_ref,
                w2_ref, b2_ref,
                w3_ref, b3_ref,
                w4_ref, b4_ref,
                o_ref):
    # x tile and weights are bf16; matmuls accumulate fp32 on the MXU.
    x = x_ref[...]                                               # [TB, 784] bf16

    # fc1 + relu
    h = jnp.dot(x, w1_ref[...], preferred_element_type=jnp.float32) + b1_ref[...]
    h = jnp.maximum(h, 0.0).astype(jnp.bfloat16)
    # fc2 + relu
    h = jnp.dot(h, w2_ref[...], preferred_element_type=jnp.float32) + b2_ref[...]
    h = jnp.maximum(h, 0.0).astype(jnp.bfloat16)
    # fc3 + relu
    h = jnp.dot(h, w3_ref[...], preferred_element_type=jnp.float32) + b3_ref[...]
    h = jnp.maximum(h, 0.0).astype(jnp.bfloat16)
    # fc4 (logits stay fp32)
    logits = jnp.dot(h, w4_ref[...], preferred_element_type=jnp.float32) + b4_ref[...]

    # numerically stable log_softmax over the class axis (dim=1)
    m = jnp.max(logits, axis=-1, keepdims=True)
    z = logits - m
    lse = jnp.log(jnp.sum(jnp.exp(z), axis=-1, keepdims=True))
    o_ref[...] = (z - lse).astype(o_ref.dtype)


def _round_up(n, m):
    return ((n + m - 1) // m) * m


def net2_forward(x, params, *, tile_b=DEFAULT_TILE_B):
    """x: [B, 1, 28, 28] (NCHW) or [B, 784]. Returns log-probs [B, 10] (fp32)."""
    B = x.shape[0]
    x2d = x.reshape(B, -1).astype(jnp.bfloat16)          # torch.flatten(x, 1)

    # Tile the batch: multiple of 16 (bf16 sublane packing), padded up to TILE_B.
    tb = min(tile_b, _round_up(B, 16))
    Bp = _round_up(B, tb)
    if Bp != B:
        x2d = jnp.pad(x2d, ((0, Bp - B), (0, 0)))

    (w1, b1), (w2, b2), (w3, b3), (w4, b4) = params
    w1, w2, w3, w4 = (w.astype(jnp.bfloat16) for w in (w1, w2, w3, w4))
    b1, b2, b3, b4 = (b.astype(jnp.float32) for b in (b1, b2, b3, b4))

    grid = (Bp // tb,)

    # Advisory cost for XLA's scheduler around the custom call.
    flops = 2 * Bp * sum(i * o for i, o in DIMS)
    w_bytes = sum(i * o * 2 + o * 4 for i, o in DIMS)
    cost = pl.CostEstimate(
        flops=flops,
        transcendentals=Bp * 10,                   # exp in log_softmax
        bytes_accessed=Bp * 784 * 2 + Bp * 10 * 4 + w_bytes,
    )

    resident = lambda i: (0, 0)                    # same block every step -> no re-DMA

    out = pl.pallas_call(
        _mlp_kernel,
        out_shape=jax.ShapeDtypeStruct((Bp, 10), jnp.float32),
        grid=grid,
        in_specs=[
            pl.BlockSpec((tb, 784), lambda i: (i, 0)),   # streamed x tiles
            pl.BlockSpec((784, 256), resident),          # fc1 weight (bf16)
            pl.BlockSpec((1, 256), resident),            # fc1 bias   (fp32)
            pl.BlockSpec((256, 128), resident),          # fc2 weight
            pl.BlockSpec((1, 128), resident),            # fc2 bias
            pl.BlockSpec((128, 64), resident),           # fc3 weight
            pl.BlockSpec((1, 64), resident),             # fc3 bias
            pl.BlockSpec((64, 10), resident),            # fc4 weight
            pl.BlockSpec((1, 10), resident),             # fc4 bias
        ],
        out_specs=pl.BlockSpec((tb, 10), lambda i: (i, 0)),
        compiler_params=pltpu.CompilerParams(
            dimension_semantics=("parallel",),           # megacore on v7x
        ),
        cost_estimate=cost,
    )(x2d, w1, b1, w2, b2, w3, b3, w4, b4)

    return out[:B]


def init_params(key):
    """Deterministic init mimicking nn.Linear (uniform +/- 1/sqrt(fan_in)).

    Weights stored as (in, out) fp32; biases as (1, out) fp32 for in-kernel
    broadcast.  (Casting to bf16 happens in net2_forward.)
    """
    params = []
    for (fan_in, fan_out) in DIMS:
        key, kw, kb = jax.random.split(key, 3)
        bound = 1.0 / jnp.sqrt(float(fan_in))
        w = jax.random.uniform(kw, (fan_in, fan_out), jnp.float32, -bound, bound)
        b = jax.random.uniform(kb, (1, fan_out), jnp.float32, -bound, bound)
        params.append((w, b))
    return params


def reference_forward(x, params):
    """Pure-JAX reference with the same bf16-weights / fp32-accumulate recipe."""
    B = x.shape[0]
    h = x.reshape(B, -1).astype(jnp.bfloat16)
    for i, (w, b) in enumerate(params):
        h = jnp.dot(h, w.astype(jnp.bfloat16),
                    preferred_element_type=jnp.float32) + b.astype(jnp.float32)
        if i < 3:
            h = jnp.maximum(h, 0.0).astype(jnp.bfloat16)
    return jax.nn.log_softmax(h, axis=1)


if __name__ == "__main__":
    key = jax.random.PRNGKey(0)
    kparams, kx = jax.random.split(key)

    params = init_params(kparams)
    # MNIST-like input, NCHW, small batch (exercises the padding/tail path).
    x = jax.random.normal(kx, (8, 1, 28, 28), jnp.float32)

    out = net2_forward(x, params)
    out = jax.block_until_ready(out)

    ref = reference_forward(x, params)
    assert out.shape == (8, 10)
    assert jnp.allclose(out, ref, atol=1e-2, rtol=1e-2), "mismatch vs reference"
    # Sanity: rows are valid log-prob distributions.
    assert jnp.allclose(jnp.sum(jnp.exp(out), axis=1), 1.0, atol=1e-3)

    print("KERNEL_OK")
</pallas_src>

<mosaic_0001>
module attributes {stable_mosaic.version = 11 : i64} {
  func.func @_mlp_kernel(%arg0: i32, %arg1: memref<16x784xbf16, #tpu.memory_space<vmem>>, %arg2: memref<784x256xbf16, #tpu.memory_space<vmem>>, %arg3: memref<1x256xf32, #tpu.memory_space<vmem>>, %arg4: memref<256x128xbf16, #tpu.memory_space<vmem>>, %arg5: memref<1x128xf32, #tpu.memory_space<vmem>>, %arg6: memref<128x64xbf16, #tpu.memory_space<vmem>>, %arg7: memref<1x64xf32, #tpu.memory_space<vmem>>, %arg8: memref<64x10xbf16, #tpu.memory_space<vmem>>, %arg9: memref<1x10xf32, #tpu.memory_space<vmem>>, %arg10: memref<16x10xf32, #tpu.memory_space<vmem>>) attributes {dimension_semantics = [#tpu.dimension_semantics<parallel>], iteration_bounds = array<i64: 1>, scalar_prefetch = 0 : i64, scratch_operands = 0 : i64, tpu.core_type = #tpu.core_type<tc>, window_params = [{transform_indices = @transform_0, window_bounds = array<i64: 16, 784>}, {pipeline_mode = #tpu.pipeline_mode<synchronous>, transform_indices = @transform_1, window_bounds = array<i64: 784, 256>}, {pipeline_mode = #tpu.pipeline_mode<synchronous>, transform_indices = @transform_2, window_bounds = array<i64: 1, 256>}, {pipeline_mode = #tpu.pipeline_mode<synchronous>, transform_indices = @transform_3, window_bounds = array<i64: 256, 128>}, {pipeline_mode = #tpu.pipeline_mode<synchronous>, transform_indices = @transform_4, window_bounds = array<i64: 1, 128>}, {pipeline_mode = #tpu.pipeline_mode<synchronous>, transform_indices = @transform_5, window_bounds = array<i64: 128, 64>}, {pipeline_mode = #tpu.pipeline_mode<synchronous>, transform_indices = @transform_6, window_bounds = array<i64: 1, 64>}, {pipeline_mode = #tpu.pipeline_mode<synchronous>, transform_indices = @transform_7, window_bounds = array<i64: 64, 10>}, {pipeline_mode = #tpu.pipeline_mode<synchronous>, transform_indices = @transform_8, window_bounds = array<i64: 1, 10>}, {transform_indices = @transform_9, window_bounds = array<i64: 16, 10>}]} {
    %c0 = arith.constant 0 : index
    %c0_0 = arith.constant 0 : index
    %0 = vector.load %arg1[%c0, %c0_0] : memref<16x784xbf16, #tpu.memory_space<vmem>>, vector<16x784xbf16>
    %c0_1 = arith.constant 0 : index
    %c0_2 = arith.constant 0 : index
    %1 = vector.load %arg2[%c0_1, %c0_2] : memref<784x256xbf16, #tpu.memory_space<vmem>>, vector<784x256xbf16>
    %cst = arith.constant dense<0.000000e+00> : vector<16x256xf32>
    %2 = tpu.matmul %0, %1, %cst {dimension_numbers = #tpu.dot_dimension_numbers<[1], [0], [0], [1], [0, 0, 1, 1], [], []>} : vector<16x784xbf16>, vector<784x256xbf16>, vector<16x256xf32> -> vector<16x256xf32>
    %c0_3 = arith.constant 0 : index
    %c0_4 = arith.constant 0 : index
    %3 = vector.load %arg3[%c0_3, %c0_4] : memref<1x256xf32, #tpu.memory_space<vmem>>, vector<1x256xf32>
    %4 = vector.broadcast %3 : vector<1x256xf32> to vector<16x256xf32>
    %5 = arith.addf %2, %4 : vector<16x256xf32>
    %cst_5 = arith.constant 0.000000e+00 : f32
    %6 = vector.broadcast %cst_5 : f32 to vector<16x256xf32>
    %7 = arith.maximumf %5, %6 : vector<16x256xf32>
    %8 = arith.truncf %7 : vector<16x256xf32> to vector<16x256xbf16>
    %c0_6 = arith.constant 0 : index
    %c0_7 = arith.constant 0 : index
    %9 = vector.load %arg4[%c0_6, %c0_7] : memref<256x128xbf16, #tpu.memory_space<vmem>>, vector<256x128xbf16>
    %cst_8 = arith.constant dense<0.000000e+00> : vector<16x128xf32>
    %10 = tpu.matmul %8, %9, %cst_8 {dimension_numbers = #tpu.dot_dimension_numbers<[1], [0], [0], [1], [0, 0, 1, 1], [], []>} : vector<16x256xbf16>, vector<256x128xbf16>, vector<16x128xf32> -> vector<16x128xf32>
    %c0_9 = arith.constant 0 : index
    %c0_10 = arith.constant 0 : index
    %11 = vector.load %arg5[%c0_9, %c0_10] : memref<1x128xf32, #tpu.memory_space<vmem>>, vector<1x128xf32>
    %12 = vector.broadcast %11 : vector<1x128xf32> to vector<16x128xf32>
    %13 = arith.addf %10, %12 : vector<16x128xf32>
    %cst_11 = arith.constant 0.000000e+00 : f32
    %14 = vector.broadcast %cst_11 : f32 to vector<16x128xf32>
    %15 = arith.maximumf %13, %14 : vector<16x128xf32>
    %16 = arith.truncf %15 : vector<16x128xf32> to vector<16x128xbf16>
    %c0_12 = arith.constant 0 : index
    %c0_13 = arith.constant 0 : index
    %17 = vector.load %arg6[%c0_12, %c0_13] : memref<128x64xbf16, #tpu.memory_space<vmem>>, vector<128x64xbf16>
    %cst_14 = arith.constant dense<0.000000e+00> : vector<16x64xf32>
    %18 = tpu.matmul %16, %17, %cst_14 {dimension_numbers = #tpu.dot_dimension_numbers<[1], [0], [0], [1], [0, 0, 1, 1], [], []>} : vector<16x128xbf16>, vector<128x64xbf16>, vector<16x64xf32> -> vector<16x64xf32>
    %c0_15 = arith.constant 0 : index
    %c0_16 = arith.constant 0 : index
    %19 = vector.load %arg7[%c0_15, %c0_16] : memref<1x64xf32, #tpu.memory_space<vmem>>, vector<1x64xf32>
    %20 = vector.broadcast %19 : vector<1x64xf32> to vector<16x64xf32>
    %21 = arith.addf %18, %20 : vector<16x64xf32>
    %cst_17 = arith.constant 0.000000e+00 : f32
    %22 = vector.broadcast %cst_17 : f32 to vector<16x64xf32>
    %23 = arith.maximumf %21, %22 : vector<16x64xf32>
    %24 = arith.truncf %23 : vector<16x64xf32> to vector<16x64xbf16>
    %c0_18 = arith.constant 0 : index
    %c0_19 = arith.constant 0 : index
    %25 = vector.load %arg8[%c0_18, %c0_19] : memref<64x10xbf16, #tpu.memory_space<vmem>>, vector<64x10xbf16>
    %cst_20 = arith.constant dense<0.000000e+00> : vector<16x10xf32>
    %26 = tpu.matmul %24, %25, %cst_20 {dimension_numbers = #tpu.dot_dimension_numbers<[1], [0], [0], [1], [0, 0, 1, 1], [], []>} : vector<16x64xbf16>, vector<64x10xbf16>, vector<16x10xf32> -> vector<16x10xf32>
    %c0_21 = arith.constant 0 : index
    %c0_22 = arith.constant 0 : index
    %27 = vector.load %arg9[%c0_21, %c0_22] : memref<1x10xf32, #tpu.memory_space<vmem>>, vector<1x10xf32>
    %28 = vector.broadcast %27 : vector<1x10xf32> to vector<16x10xf32>
    %29 = arith.addf %26, %28 : vector<16x10xf32>
    %cst_23 = arith.constant dense<0xFF800000> : vector<16xf32>
    %30 = vector.multi_reduction <maximumf>, %29, %cst_23 [1] : vector<16x10xf32> to vector<16xf32>
    %31 = vector.shape_cast %30 : vector<16xf32> to vector<16x1xf32>
    %32 = vector.broadcast %31 : vector<16x1xf32> to vector<16x10xf32>
    %33 = arith.subf %29, %32 : vector<16x10xf32>
    %34 = math.exp %33 : vector<16x10xf32>
    %cst_24 = arith.constant dense<0.000000e+00> : vector<16xf32>
    %35 = vector.multi_reduction <add>, %34, %cst_24 [1] : vector<16x10xf32> to vector<16xf32>
    %36 = vector.shape_cast %35 : vector<16xf32> to vector<16x1xf32>
    %37 = math.log %36 : vector<16x1xf32>
    %38 = vector.broadcast %37 : vector<16x1xf32> to vector<16x10xf32>
    %39 = arith.subf %33, %38 : vector<16x10xf32>
    %c0_25 = arith.constant 0 : index
    %c0_26 = arith.constant 0 : index
    %40 = vector.load %arg10[%c0_25, %c0_26] : memref<16x10xf32, #tpu.memory_space<vmem>>, vector<16x10xf32>
    tpu.vector_store %arg10[%c0_25, %c0_26], %39 {strides = array<i32>} : memref<16x10xf32, #tpu.memory_space<vmem>>, vector<16x10xf32>,
    return
  }
  func.func @transform_0(%arg0: i32) -> (i32, i32) {
    %c0_i32 = arith.constant 0 : i32
    %c0_i32_0 = arith.constant 0 : i32
    return %arg0, %c0_i32 : i32, i32
  }
  func.func @transform_1(%arg0: i32) -> (i32, i32) {
    %c0_i32 = arith.constant 0 : i32
    %c0_i32_0 = arith.constant 0 : i32
    %c0_i32_1 = arith.constant 0 : i32
    return %c0_i32, %c0_i32_0 : i32, i32
  }
  func.func @transform_2(%arg0: i32) -> (i32, i32) {
    %c0_i32 = arith.constant 0 : i32
    %c0_i32_0 = arith.constant 0 : i32
    %c0_i32_1 = arith.constant 0 : i32
    return %c0_i32, %c0_i32_0 : i32, i32
  }
  func.func @transform_3(%arg0: i32) -> (i32, i32) {
    %c0_i32 = arith.constant 0 : i32
    %c0_i32_0 = arith.constant 0 : i32
    %c0_i32_1 = arith.constant 0 : i32
    return %c0_i32, %c0_i32_0 : i32, i32
  }
  func.func @transform_4(%arg0: i32) -> (i32, i32) {
    %c0_i32 = arith.constant 0 : i32
    %c0_i32_0 = arith.constant 0 : i32
    %c0_i32_1 = arith.constant 0 : i32
    return %c0_i32, %c0_i32_0 : i32, i32
  }
  func.func @transform_5(%arg0: i32) -> (i32, i32) {
    %c0_i32 = arith.constant 0 : i32
    %c0_i32_0 = arith.constant 0 : i32
    %c0_i32_1 = arith.constant 0 : i32
    return %c0_i32, %c0_i32_0 : i32, i32
  }
  func.func @transform_6(%arg0: i32) -> (i32, i32) {
    %c0_i32 = arith.constant 0 : i32
    %c0_i32_0 = arith.constant 0 : i32
    %c0_i32_1 = arith.constant 0 : i32
    return %c0_i32, %c0_i32_0 : i32, i32
  }
  func.func @transform_7(%arg0: i32) -> (i32, i32) {
    %c0_i32 = arith.constant 0 : i32
    %c0_i32_0 = arith.constant 0 : i32
    %c0_i32_1 = arith.constant 0 : i32
    return %c0_i32, %c0_i32_0 : i32, i32
  }
  func.func @transform_8(%arg0: i32) -> (i32, i32) {
    %c0_i32 = arith.constant 0 : i32
    %c0_i32_0 = arith.constant 0 : i32
    %c0_i32_1 = arith.constant 0 : i32
    return %c0_i32, %c0_i32_0 : i32, i32
  }
  func.func @transform_9(%arg0: i32) -> (i32, i32) {
    %c0_i32 = arith.constant 0 : i32
    %c0_i32_0 = arith.constant 0 : i32
    return %arg0, %c0_i32 : i32, i32
  }
}

</mosaic_0001>

<llo_original>
// kernel: tpu_custom_call.1
$region0: #{tpu_custom_call.1}
  #allocation0 [shape = 'u32[]', space=smem, size = 0x4, offset = 0x4, fixed_abs, tag = 'smem constant byte address 0x4 - core index']
  #allocation1 [shape = 'u32[72,128]{1,0:T(1,128)}', space=vmem, size = 0x9000, scoped, tag = 'internal scratch']
  %s0 = inlined_call_operand.hbm [shape: bf16[16,784], index: 0, kind: input, shape index: {}]
  %s1 = inlined_call_operand.hbm [shape: bf16[784,256], index: 1, kind: input, shape index: {}]
  %s2 = inlined_call_operand.vmem [shape: f32[1,256], index: 2, kind: input, shape index: {}]
  %s3 = inlined_call_operand.vmem [shape: bf16[256,128], index: 3, kind: input, shape index: {}]
  %s4 = inlined_call_operand.vmem [shape: f32[1,128], index: 4, kind: input, shape index: {}]
  %s5 = inlined_call_operand.vmem [shape: bf16[128,64], index: 5, kind: input, shape index: {}]
  %s6 = inlined_call_operand.vmem [shape: f32[1,64], index: 6, kind: input, shape index: {}]
  %s7 = inlined_call_operand.vmem [shape: bf16[64,10], index: 7, kind: input, shape index: {}]
  %s8 = inlined_call_operand.vmem [shape: f32[1,10], index: 8, kind: input, shape index: {}]
  %s9 = inlined_call_operand.hbm [shape: f32[16,10], index: 9, kind: output, shape index: {}]
  %s10 = sld [smem:[#allocation0]]
  $region54: #{tpu_custom_call.1} parent=0
    _
  %s12 = ssub.s32 1, %s10
  %s13 = scalar_select 0, %s12, %s10
  $region1: #{tpu_custom_call.1} parent=0
    #allocation2 [shape = 'u8[28672]{0}', space=vmem, size = 0x7000, scoped, tag = 'input window, operand 0, single buffered']
    #allocation3 [shape = 's32[1]{0}', space=sflag, size = 0x4, scoped, tag = 'scoped memory for tpu_custom_call.1']
    #allocation4 [shape = 's32[1]{0}', space=sflag, size = 0x4, scoped, tag = 'scoped memory for tpu_custom_call.1']
    #allocation5 [shape = 'u8[401408]{0}', space=vmem, size = 0x62000, scoped, tag = 'input window, operand 1, single buffered']
    #allocation6 [shape = 's32[1]{0}', space=sflag, size = 0x4, scoped, tag = 'scoped memory for tpu_custom_call.1']
    #allocation7 [shape = 'u8[8192]{0}', space=vmem, size = 0x2000, scoped, tag = 'output window, operand 0, single buffered']
    %14 = vsyncpa [#allocation3], 0
    %15 = vsyncpa [#allocation6], 0
    %16 = vsyncpa [#allocation4], 0
    // Predicated region
    $region2: #{tpu_custom_call.1} parent=1 // pred_check
      _
    $region3: #{tpu_custom_call.1} parent=1 // pred_check_branch
      %18 = sbr.rel (0) target = $region5
    $region4: #{tpu_custom_call.1} parent=1 // pred_region
      %20 = vsyncadd [#allocation3], 0
      %s21 = sshll.u32 %s0, 4
      %s22 = int_to_ptr.hbm [resolvable:$true] %s21
      %s23 = sshll.u32 [#allocation2], 4
      %s24 = int_to_ptr.vmem [resolvable:$true] %s23
      %29 = dma.hbm_to_vmem [thread:$0]  %s22, 896, %s24, [#allocation3], 448, 448, 28
    $region5: #{tpu_custom_call.1} parent=1 // pred_fallthru
      _
    // Predicated region
    $region6: #{tpu_custom_call.1} parent=1 // pred_check
      _
    $region7: #{tpu_custom_call.1} parent=1 // pred_check_branch
      %31 = sbr.rel (0) target = $region9
    $region8: #{tpu_custom_call.1} parent=1 // pred_region
      %33 = vsyncadd [#allocation6], 0
      %s34 = sshll.u32 %s1, 4
      %s35 = int_to_ptr.hbm [resolvable:$true] %s34
      %s36 = sshll.u32 [#allocation5], 4
      %s37 = int_to_ptr.vmem [resolvable:$true] %s36
      %42 = dma.hbm_to_vmem [thread:$0]  %s35, 12544, %s37, [#allocation6], 128, 128, 8
    $region9: #{tpu_custom_call.1} parent=1 // pred_fallthru
      _
    // Predicated region
    $region10: #{tpu_custom_call.1} parent=1 // pred_check
      _
    $region11: #{tpu_custom_call.1} parent=1 // pred_check_branch
      %44 = sbr.rel (0) target = $region13
    $region12: #{tpu_custom_call.1} parent=1 // pred_region
      _
    $region13: #{tpu_custom_call.1} parent=1 // pred_fallthru
      _
    // Predicated region
    $region14: #{tpu_custom_call.1} parent=1 // pred_check
      _
    $region15: #{tpu_custom_call.1} parent=1 // pred_check_branch
      %46 = sbr.rel (0) target = $region17
    $region16: #{tpu_custom_call.1} parent=1 // pred_region
      _
    $region17: #{tpu_custom_call.1} parent=1 // pred_fallthru
      _
    // Predicated region
    $region18: #{tpu_custom_call.1} parent=1 // pred_check
      _
    $region19: #{tpu_custom_call.1} parent=1 // pred_check_branch
      %48 = sbr.rel (0) target = $region21
    $region20: #{tpu_custom_call.1} parent=1 // pred_region
      _
    $region21: #{tpu_custom_call.1} parent=1 // pred_fallthru
      _
    // Predicated region
    $region22: #{tpu_custom_call.1} parent=1 // pred_check
      _
    $region23: #{tpu_custom_call.1} parent=1 // pred_check_branch
      %50 = sbr.rel (0) target = $region25
    $region24: #{tpu_custom_call.1} parent=1 // pred_region
      _
    $region25: #{tpu_custom_call.1} parent=1 // pred_fallthru
      _
    // Predicated region
    $region26: #{tpu_custom_call.1} parent=1 // pred_check
      _
    $region27: #{tpu_custom_call.1} parent=1 // pred_check_branch
      %52 = sbr.rel (0) target = $region29
    $region28: #{tpu_custom_call.1} parent=1 // pred_region
      _
    $region29: #{tpu_custom_call.1} parent=1 // pred_fallthru
      _
    // Predicated region
    $region30: #{tpu_custom_call.1} parent=1 // pred_check
      _
    $region31: #{tpu_custom_call.1} parent=1 // pred_check_branch
      %54 = sbr.rel (0) target = $region33
    $region32: #{tpu_custom_call.1} parent=1 // pred_region
      _
    $region33: #{tpu_custom_call.1} parent=1 // pred_fallthru
      _
    // Predicated region
    $region34: #{tpu_custom_call.1} parent=1 // pred_check
      _
    $region35: #{tpu_custom_call.1} parent=1 // pred_check_branch
      %56 = sbr.rel (0) target = $region37
    $region36: #{tpu_custom_call.1} parent=1 // pred_region
      _
    $region37: #{tpu_custom_call.1} parent=1 // pred_fallthru
      _
    // Predicated region
    $region38: #{tpu_custom_call.1} parent=1 // pred_check
      _
    $region39: #{tpu_custom_call.1} parent=1 // pred_check_branch
      %58 = sbr.rel (0) target = $region41
    $region40: #{tpu_custom_call.1} parent=1 // pred_region
      %60 = dma.done [#allocation3], 896
    $region41: #{tpu_custom_call.1} parent=1 // pred_fallthru
      _
    // Predicated region
    $region42: #{tpu_custom_call.1} parent=1 // pred_check
      _
    $region43: #{tpu_custom_call.1} parent=1 // pred_check_branch
      %62 = sbr.rel (0) target = $region45
    $region44: #{tpu_custom_call.1} parent=1 // pred_region
      %64 = dma.done [#allocation6], 12544
    $region45: #{tpu_custom_call.1} parent=1 // pred_fallthru
      _
    %v66 = vld [vmem:[#allocation2] sm:$0xff]
    %v67 = vld [vmem:[#allocation2 + $0x8] sm:$0xff]
    %v68 = vld [vmem:[#allocation2 + $0x10] sm:$0xff]
    %v69 = vld [vmem:[#allocation2 + $0x18] sm:$0xf]
    %v70 = vld [vmem:[#allocation2 + $0x1c] sm:$0xff]
    %v71 = vld [vmem:[#allocation2 + $0x24] sm:$0xff]
    %v72 = vld [vmem:[#allocation2 + $0x2c] sm:$0xff]
    %v73 = vld [vmem:[#allocation2 + $0x34] sm:$0xf]
    %v74 = vld [vmem:[#allocation5] sm:$0xff]
    %v75 = vld [vmem:[#allocation5 + $0x8] sm:$0xff]
    %v76 = vld [vmem:[#allocation5 + $0x10] sm:$0xff]
    %v77 = vld [vmem:[#allocation5 + $0x18] sm:$0xff]
    %v78 = vld [vmem:[#allocation5 + $0x20] sm:$0xff]
    %v79 = vld [vmem:[#allocation5 + $0x28] sm:$0xff]
    %v80 = vld [vmem:[#allocation5 + $0x30] sm:$0xff]
    %v81 = vld [vmem:[#allocation5 + $0x38] sm:$0xff]
    %v82 = vld [vmem:[#allocation5 + $0x40] sm:$0xff]
    %v83 = vld [vmem:[#allocation5 + $0x48] sm:$0xff]
    %v84 = vld [vmem:[#allocation5 + $0x50] sm:$0xff]
    %v85 = vld [vmem:[#allocation5 + $0x58] sm:$0xff]
    %v86 = vld [vmem:[#allocation5 + $0x60] sm:$0xff]
    %v87 = vld [vmem:[#allocation5 + $0x68] sm:$0xff]
    %v88 = vld [vmem:[#allocation5 + $0x70] sm:$0xff]
    %v89 = vld [vmem:[#allocation5 + $0x78] sm:$0xff]
    %v90 = vld [vmem:[#allocation5 + $0x80] sm:$0xff]
    %v91 = vld [vmem:[#allocation5 + $0x88] sm:$0xff]
    %v92 = vld [vmem:[#allocation5 + $0x90] sm:$0xff]
    %v93 = vld [vmem:[#allocation5 + $0x98] sm:$0xff]
    %v94 = vld [vmem:[#allocation5 + $0xa0] sm:$0xff]
    %v95 = vld [vmem:[#allocation5 + $0xa8] sm:$0xff]
    %v96 = vld [vmem:[#allocation5 + $0xb0] sm:$0xff]
    %v97 = vld [vmem:[#allocation5 + $0xb8] sm:$0xff]
    %v98 = vld [vmem:[#allocation5 + $0xc0] sm:$0xff]
    %v99 = vld [vmem:[#allocation5 + $0xc8] sm:$0xff]
    %v100 = vld [vmem:[#allocation5 + $0xd0] sm:$0xff]
    %v101 = vld [vmem:[#allocation5 + $0xd8] sm:$0xff]
    %v102 = vld [vmem:[#allocation5 + $0xe0] sm:$0xff]
    %v103 = vld [vmem:[#allocation5 + $0xe8] sm:$0xff]
    %v104 = vld [vmem:[#allocation5 + $0xf0] sm:$0xff]
    %v105 = vld [vmem:[#allocation5 + $0xf8] sm:$0xff]
    %v106 = vld [vmem:[#allocation5 + $0x100] sm:$0xff]
    %v107 = vld [vmem:[#allocation5 + $0x108] sm:$0xff]
    %v108 = vld [vmem:[#allocation5 + $0x110] sm:$0xff]
    %v109 = vld [vmem:[#allocation5 + $0x118] sm:$0xff]
    %v110 = vld [vmem:[#allocation5 + $0x120] sm:$0xff]
    %v111 = vld [vmem:[#allocation5 + $0x128] sm:$0xff]
    %v112 = vld [vmem:[#allocation5 + $0x130] sm:$0xff]
    %v113 = vld [vmem:[#allocation5 + $0x138] sm:$0xff]
    %v114 = vld [vmem:[#allocation5 + $0x140] sm:$0xff]
    %v115 = vld [vmem:[#allocation5 + $0x148] sm:$0xff]
    %v116 = vld [vmem:[#allocation5 + $0x150] sm:$0xff]
    %v117 = vld [vmem:[#allocation5 + $0x158] sm:$0xff]
    %v118 = vld [vmem:[#allocation5 + $0x160] sm:$0xff]
    %v119 = vld [vmem:[#allocation5 + $0x168] sm:$0xff]
    %v120 = vld [vmem:[#allocation5 + $0x170] sm:$0xff]
    %v121 = vld [vmem:[#allocation5 + $0x178] sm:$0xff]
    %v122 = vld [vmem:[#allocation5 + $0x180] sm:$0xff]
    %v123 = vld [vmem:[#allocation5 + $0x188] sm:$0xff]
    %v124 = vld [vmem:[#allocation5 + $0x190] sm:$0xff]
    %v125 = vld [vmem:[#allocation5 + $0x198] sm:$0xff]
    %v126 = vld [vmem:[#allocation5 + $0x1a0] sm:$0xff]
    %v127 = vld [vmem:[#allocation5 + $0x1a8] sm:$0xff]
    %v128 = vld [vmem:[#allocation5 + $0x1b0] sm:$0xff]
    %v129 = vld [vmem:[#allocation5 + $0x1b8] sm:$0xff]
    %v130 = vld [vmem:[#allocation5 + $0x1c0] sm:$0xff]
    %v131 = vld [vmem:[#allocation5 + $0x1c8] sm:$0xff]
    %v132 = vld [vmem:[#allocation5 + $0x1d0] sm:$0xff]
    %v133 = vld [vmem:[#allocation5 + $0x1d8] sm:$0xff]
    %v134 = vld [vmem:[#allocation5 + $0x1e0] sm:$0xff]
    %v135 = vld [vmem:[#allocation5 + $0x1e8] sm:$0xff]
    %v136 = vld [vmem:[#allocation5 + $0x1f0] sm:$0xff]
    %v137 = vld [vmem:[#allocation5 + $0x1f8] sm:$0xff]
    %v138 = vld [vmem:[#allocation5 + $0x200] sm:$0xff]
    %v139 = vld [vmem:[#allocation5 + $0x208] sm:$0xff]
    %v140 = vld [vmem:[#allocation5 + $0x210] sm:$0xff]
    %v141 = vld [vmem:[#allocation5 + $0x218] sm:$0xff]
    %v142 = vld [vmem:[#allocation5 + $0x220] sm:$0xff]
    %v143 = vld [vmem:[#allocation5 + $0x228] sm:$0xff]
    %v144 = vld [vmem:[#allocation5 + $0x230] sm:$0xff]
    %v145 = vld [vmem:[#allocation5 + $0x238] sm:$0xff]
    %v146 = vld [vmem:[#allocation5 + $0x240] sm:$0xff]
    %v147 = vld [vmem:[#allocation5 + $0x248] sm:$0xff]
    %v148 = vld [vmem:[#allocation5 + $0x250] sm:$0xff]
    %v149 = vld [vmem:[#allocation5 + $0x258] sm:$0xff]
    %v150 = vld [vmem:[#allocation5 + $0x260] sm:$0xff]
    %v151 = vld [vmem:[#allocation5 + $0x268] sm:$0xff]
    %v152 = vld [vmem:[#allocation5 + $0x270] sm:$0xff]
    %v153 = vld [vmem:[#allocation5 + $0x278] sm:$0xff]
    %v154 = vld [vmem:[#allocation5 + $0x280] sm:$0xff]
    %v155 = vld [vmem:[#allocation5 + $0x288] sm:$0xff]
    %v156 = vld [vmem:[#allocation5 + $0x290] sm:$0xff]
    %v157 = vld [vmem:[#allocation5 + $0x298] sm:$0xff]
    %v158 = vld [vmem:[#allocation5 + $0x2a0] sm:$0xff]
    %v159 = vld [vmem:[#allocation5 + $0x2a8] sm:$0xff]
    %v160 = vld [vmem:[#allocation5 + $0x2b0] sm:$0xff]
    %v161 = vld [vmem:[#allocation5 + $0x2b8] sm:$0xff]
    %v162 = vld [vmem:[#allocation5 + $0x2c0] sm:$0xff]
    %v163 = vld [vmem:[#allocation5 + $0x2c8] sm:$0xff]
    %v164 = vld [vmem:[#allocation5 + $0x2d0] sm:$0xff]
    %v165 = vld [vmem:[#allocation5 + $0x2d8] sm:$0xff]
    %v166 = vld [vmem:[#allocation5 + $0x2e0] sm:$0xff]
    %v167 = vld [vmem:[#allocation5 + $0x2e8] sm:$0xff]
    %v168 = vld [vmem:[#allocation5 + $0x2f0] sm:$0xff]
    %v169 = vld [vmem:[#allocation5 + $0x2f8] sm:$0xff]
    %v170 = vld [vmem:[#allocation5 + $0x300] sm:$0xff]
    %v171 = vld [vmem:[#allocation5 + $0x308] sm:$0xff]
    %v172 = vld [vmem:[%s2] sm:$0x3]
    %v174 = vperm.slane %v172, 0
    %v175 = vperm.slane %v172, 1
    %v186 = vunpack.c.l.b16 %v66
    %v187 = vunpack.c.h.b16 %v66
    %v188 = vunpack.c.l.b16 %v67
    %v189 = vunpack.c.h.b16 %v67
    %v190 = vunpack.c.l.b16 %v68
    %v191 = vunpack.c.h.b16 %v68
    %v192 = vunpack.c.l.b16 %v69
    %v193 = vunpack.c.l.b16 %v70
    %v194 = vunpack.c.h.b16 %v70
    %v195 = vunpack.c.l.b16 %v71
    %v196 = vunpack.c.h.b16 %v71
    %v197 = vunpack.c.l.b16 %v72
    %v198 = vunpack.c.h.b16 %v72
    %v199 = vunpack.c.l.b16 %v73
    %v200 = vpack.c.b16 %v193, %v186
    %v201 = vpack.c.b16 %v194, %v187
    %v202 = vpack.c.b16 %v195, %v188
    %v203 = vpack.c.b16 %v196, %v189
    %v204 = vpack.c.b16 %v197, %v190
    %v205 = vpack.c.b16 %v198, %v191
    %v206 = vpack.c.b16 %v199, %v192
    %v311 = vunpack.c.l.b16 %v74
    %v312 = vunpack.c.h.b16 %v74
    %v313 = vunpack.c.l.b16 %v75
    %v314 = vunpack.c.h.b16 %v75
    %v315 = vunpack.c.l.b16 %v76
    %v316 = vunpack.c.h.b16 %v76
    %v317 = vunpack.c.l.b16 %v77
    %v318 = vunpack.c.h.b16 %v77
    %v319 = vunpack.c.l.b16 %v78
    %v320 = vunpack.c.h.b16 %v78
    %v321 = vunpack.c.l.b16 %v79
    %v322 = vunpack.c.h.b16 %v79
    %v323 = vunpack.c.l.b16 %v80
    %v324 = vunpack.c.h.b16 %v80
    %v325 = vunpack.c.l.b16 %v81
    %v326 = vunpack.c.h.b16 %v81
    %v327 = vunpack.c.l.b16 %v82
    %v328 = vunpack.c.h.b16 %v82
    %v329 = vunpack.c.l.b16 %v83
    %v330 = vunpack.c.h.b16 %v83
    %v331 = vunpack.c.l.b16 %v84
    %v332 = vunpack.c.h.b16 %v84
    %v333 = vunpack.c.l.b16 %v85
    %v334 = vunpack.c.h.b16 %v85
    %v335 = vunpack.c.l.b16 %v86
    %v336 = vunpack.c.h.b16 %v86
    %v337 = vunpack.c.l.b16 %v87
    %v338 = vunpack.c.h.b16 %v87
    %v339 = vunpack.c.l.b16 %v88
    %v340 = vunpack.c.h.b16 %v88
    %v341 = vunpack.c.l.b16 %v89
    %v342 = vunpack.c.h.b16 %v89
    %v343 = vunpack.c.l.b16 %v90
    %v344 = vunpack.c.h.b16 %v90
    %v345 = vunpack.c.l.b16 %v91
    %v346 = vunpack.c.h.b16 %v91
    %v347 = vunpack.c.l.b16 %v92
    %v348 = vunpack.c.h.b16 %v92
    %v349 = vunpack.c.l.b16 %v93
    %v350 = vunpack.c.h.b16 %v93
    %v351 = vunpack.c.l.b16 %v94
    %v352 = vunpack.c.h.b16 %v94
    %v353 = vunpack.c.l.b16 %v95
    %v354 = vunpack.c.h.b16 %v95
    %v355 = vunpack.c.l.b16 %v96
    %v356 = vunpack.c.h.b16 %v96
    %v357 = vunpack.c.l.b16 %v97
    %v358 = vunpack.c.h.b16 %v97
    %v359 = vunpack.c.l.b16 %v98
    %v360 = vunpack.c.h.b16 %v98
    %v361 = vunpack.c.l.b16 %v99
    %v362 = vunpack.c.h.b16 %v99
    %v363 = vunpack.c.l.b16 %v100
    %v364 = vunpack.c.h.b16 %v100
    %v365 = vunpack.c.l.b16 %v101
    %v366 = vunpack.c.h.b16 %v101
    %v367 = vunpack.c.l.b16 %v102
    %v368 = vunpack.c.h.b16 %v102
    %v369 = vunpack.c.l.b16 %v103
    %v370 = vunpack.c.h.b16 %v103
    %v371 = vunpack.c.l.b16 %v104
    %v372 = vunpack.c.h.b16 %v104
    %v373 = vunpack.c.l.b16 %v105
    %v374 = vunpack.c.h.b16 %v105
    %v375 = vunpack.c.l.b16 %v106
    %v376 = vunpack.c.h.b16 %v106
    %v377 = vunpack.c.l.b16 %v107
    %v378 = vunpack.c.h.b16 %v107
    %v379 = vunpack.c.l.b16 %v108
    %v380 = vunpack.c.h.b16 %v108
    %v381 = vunpack.c.l.b16 %v109
    %v382 = vunpack.c.h.b16 %v109
    %v383 = vunpack.c.l.b16 %v110
    %v384 = vunpack.c.h.b16 %v110
    %v385 = vunpack.c.l.b16 %v111
    %v386 = vunpack.c.h.b16 %v111
    %v387 = vunpack.c.l.b16 %v112
    %v388 = vunpack.c.h.b16 %v112
    %v389 = vunpack.c.l.b16 %v113
    %v390 = vunpack.c.h.b16 %v113
    %v391 = vunpack.c.l.b16 %v114
    %v392 = vunpack.c.h.b16 %v114
    %v393 = vunpack.c.l.b16 %v115
    %v394 = vunpack.c.h.b16 %v115
    %v395 = vunpack.c.l.b16 %v116
    %v396 = vunpack.c.h.b16 %v116
    %v397 = vunpack.c.l.b16 %v117
    %v398 = vunpack.c.h.b16 %v117
    %v399 = vunpack.c.l.b16 %v118
    %v400 = vunpack.c.h.b16 %v118
    %v401 = vunpack.c.l.b16 %v119
    %v402 = vunpack.c.h.b16 %v119
    %v403 = vunpack.c.l.b16 %v120
    %v404 = vunpack.c.h.b16 %v120
    %v405 = vunpack.c.l.b16 %v121
    %v406 = vunpack.c.h.b16 %v121
    %v407 = vunpack.c.l.b16 %v122
    %v408 = vunpack.c.h.b16 %v122
    %v409 = vunpack.c.l.b16 %v123
    %v410 = vunpack.c.h.b16 %v123
    %v411 = vunpack.c.l.b16 %v124
    %v412 = vunpack.c.h.b16 %v124
    %v413 = vunpack.c.l.b16 %v125
    %v414 = vunpack.c.h.b16 %v125
    %v415 = vunpack.c.l.b16 %v126
    %v416 = vunpack.c.h.b16 %v126
    %v417 = vunpack.c.l.b16 %v127
    %v418 = vunpack.c.h.b16 %v127
    %v419 = vunpack.c.l.b16 %v128
    %v420 = vunpack.c.h.b16 %v128
    %v421 = vunpack.c.l.b16 %v129
    %v422 = vunpack.c.h.b16 %v129
    %v423 = vunpack.c.l.b16 %v130
    %v424 = vunpack.c.h.b16 %v130
    %v425 = vunpack.c.l.b16 %v131
    %v426 = vunpack.c.h.b16 %v131
    %v427 = vunpack.c.l.b16 %v132
    %v428 = vunpack.c.h.b16 %v132
    %v429 = vunpack.c.l.b16 %v133
    %v430 = vunpack.c.h.b16 %v133
    %v431 = vunpack.c.l.b16 %v134
    %v432 = vunpack.c.h.b16 %v134
    %v433 = vunpack.c.l.b16 %v135
    %v434 = vunpack.c.h.b16 %v135
    %v435 = vunpack.c.l.b16 %v136
    %v436 = vunpack.c.h.b16 %v136
    %v437 = vunpack.c.l.b16 %v137
    %v438 = vunpack.c.h.b16 %v137
    %v439 = vunpack.c.l.b16 %v138
    %v440 = vunpack.c.h.b16 %v138
    %v441 = vunpack.c.l.b16 %v139
    %v442 = vunpack.c.h.b16 %v139
    %v443 = vunpack.c.l.b16 %v140
    %v444 = vunpack.c.h.b16 %v140
    %v445 = vunpack.c.l.b16 %v141
    %v446 = vunpack.c.h.b16 %v141
    %v447 = vunpack.c.l.b16 %v142
    %v448 = vunpack.c.h.b16 %v142
    %v449 = vunpack.c.l.b16 %v143
    %v450 = vunpack.c.h.b16 %v143
    %v451 = vunpack.c.l.b16 %v144
    %v452 = vunpack.c.h.b16 %v144
    %v453 = vunpack.c.l.b16 %v145
    %v454 = vunpack.c.h.b16 %v145
    %v455 = vunpack.c.l.b16 %v146
    %v456 = vunpack.c.h.b16 %v146
    %v457 = vunpack.c.l.b16 %v147
    %v458 = vunpack.c.h.b16 %v147
    %v459 = vunpack.c.l.b16 %v148
    %v460 = vunpack.c.h.b16 %v148
    %v461 = vunpack.c.l.b16 %v149
    %v462 = vunpack.c.h.b16 %v149
    %v463 = vunpack.c.l.b16 %v150
    %v464 = vunpack.c.h.b16 %v150
    %v465 = vunpack.c.l.b16 %v151
    %v466 = vunpack.c.h.b16 %v151
    %v467 = vunpack.c.l.b16 %v152
    %v468 = vunpack.c.h.b16 %v152
    %v469 = vunpack.c.l.b16 %v153
    %v470 = vunpack.c.h.b16 %v153
    %v471 = vunpack.c.l.b16 %v154
    %v472 = vunpack.c.h.b16 %v154
    %v473 = vunpack.c.l.b16 %v155
    %v474 = vunpack.c.h.b16 %v155
    %v475 = vunpack.c.l.b16 %v156
    %v476 = vunpack.c.h.b16 %v156
    %v477 = vunpack.c.l.b16 %v157
    %v478 = vunpack.c.h.b16 %v157
    %v479 = vunpack.c.l.b16 %v158
    %v480 = vunpack.c.h.b16 %v158
    %v481 = vunpack.c.l.b16 %v159
    %v482 = vunpack.c.h.b16 %v159
    %v483 = vunpack.c.l.b16 %v160
    %v484 = vunpack.c.h.b16 %v160
    %v485 = vunpack.c.l.b16 %v161
    %v486 = vunpack.c.h.b16 %v161
    %v487 = vunpack.c.l.b16 %v162
    %v488 = vunpack.c.h.b16 %v162
    %v489 = vunpack.c.l.b16 %v163
    %v490 = vunpack.c.h.b16 %v163
    %v491 = vunpack.c.l.b16 %v164
    %v492 = vunpack.c.h.b16 %v164
    %v493 = vunpack.c.l.b16 %v165
    %v494 = vunpack.c.h.b16 %v165
    %v495 = vunpack.c.l.b16 %v166
    %v496 = vunpack.c.h.b16 %v166
    %v497 = vunpack.c.l.b16 %v167
    %v498 = vunpack.c.h.b16 %v167
    %v499 = vunpack.c.l.b16 %v168
    %v500 = vunpack.c.h.b16 %v168
    %v501 = vunpack.c.l.b16 %v169
    %v502 = vunpack.c.h.b16 %v169
    %v503 = vunpack.c.l.b16 %v170
    %v504 = vunpack.c.h.b16 %v170
    %v505 = vunpack.c.l.b16 %v171
    %v506 = vunpack.c.h.b16 %v171
    %v507 = vpack.c.b16 %v313, %v311
    %v508 = vpack.c.b16 %v314, %v312
    %v509 = vpack.c.b16 %v317, %v315
    %v510 = vpack.c.b16 %v318, %v316
    %v511 = vpack.c.b16 %v321, %v319
    %v512 = vpack.c.b16 %v322, %v320
    %v513 = vpack.c.b16 %v325, %v323
    %v514 = vpack.c.b16 %v326, %v324
    %v515 = vpack.c.b16 %v329, %v327
    %v516 = vpack.c.b16 %v330, %v328
    %v517 = vpack.c.b16 %v333, %v331
    %v518 = vpack.c.b16 %v334, %v332
    %v519 = vpack.c.b16 %v337, %v335
    %v520 = vpack.c.b16 %v338, %v336
    %v521 = vpack.c.b16 %v341, %v339
    %v522 = vpack.c.b16 %v342, %v340
    %v523 = vpack.c.b16 %v345, %v343
    %v524 = vpack.c.b16 %v346, %v344
    %v525 = vpack.c.b16 %v349, %v347
    %v526 = vpack.c.b16 %v350, %v348
    %v527 = vpack.c.b16 %v353, %v351
    %v528 = vpack.c.b16 %v354, %v352
    %v529 = vpack.c.b16 %v357, %v355
    %v530 = vpack.c.b16 %v358, %v356
    %v531 = vpack.c.b16 %v361, %v359
    %v532 = vpack.c.b16 %v362, %v360
    %v533 = vpack.c.b16 %v365, %v363
    %v534 = vpack.c.b16 %v366, %v364
    %v535 = vpack.c.b16 %v369, %v367
    %v536 = vpack.c.b16 %v370, %v368
    %v537 = vpack.c.b16 %v373, %v371
    %v538 = vpack.c.b16 %v374, %v372
    %v539 = vpack.c.b16 %v377, %v375
    %v540 = vpack.c.b16 %v378, %v376
    %v541 = vpack.c.b16 %v381, %v379
    %v542 = vpack.c.b16 %v382, %v380
    %v543 = vpack.c.b16 %v385, %v383
    %v544 = vpack.c.b16 %v386, %v384
    %v545 = vpack.c.b16 %v389, %v387
    %v546 = vpack.c.b16 %v390, %v388
    %v547 = vpack.c.b16 %v393, %v391
    %v548 = vpack.c.b16 %v394, %v392
    %v549 = vpack.c.b16 %v397, %v395
    %v550 = vpack.c.b16 %v398, %v396
    %v551 = vpack.c.b16 %v401, %v399
    %v552 = vpack.c.b16 %v402, %v400
    %v553 = vpack.c.b16 %v405, %v403
    %v554 = vpack.c.b16 %v406, %v404
    %v555 = vpack.c.b16 %v409, %v407
    %v556 = vpack.c.b16 %v410, %v408
    %v557 = vpack.c.b16 %v413, %v411
    %v558 = vpack.c.b16 %v414, %v412
    %v559 = vpack.c.b16 %v417, %v415
    %v560 = vpack.c.b16 %v418, %v416
    %v561 = vpack.c.b16 %v421, %v419
    %v562 = vpack.c.b16 %v422, %v420
    %v563 = vpack.c.b16 %v425, %v423
    %v564 = vpack.c.b16 %v426, %v424
    %v565 = vpack.c.b16 %v429, %v427
    %v566 = vpack.c.b16 %v430, %v428
    %v567 = vpack.c.b16 %v433, %v431
    %v568 = vpack.c.b16 %v434, %v432
    %v569 = vpack.c.b16 %v437, %v435
    %v570 = vpack.c.b16 %v438, %v436
    %v571 = vpack.c.b16 %v441, %v439
    %v572 = vpack.c.b16 %v442, %v440
    %v573 = vpack.c.b16 %v445, %v443
    %v574 = vpack.c.b16 %v446, %v444
    %v575 = vpack.c.b16 %v449, %v447
    %v576 = vpack.c.b16 %v450, %v448
    %v577 = vpack.c.b16 %v453, %v451
    %v578 = vpack.c.b16 %v454, %v452
    %v579 = vpack.c.b16 %v457, %v455
    %v580 = vpack.c.b16 %v458, %v456
    %v581 = vpack.c.b16 %v461, %v459
    %v582 = vpack.c.b16 %v462, %v460
    %v583 = vpack.c.b16 %v465, %v463
    %v584 = vpack.c.b16 %v466, %v464
    %v585 = vpack.c.b16 %v469, %v467
    %v586 = vpack.c.b16 %v470, %v468
    %v587 = vpack.c.b16 %v473, %v471
    %v588 = vpack.c.b16 %v474, %v472
    %v589 = vpack.c.b16 %v477, %v475
    %v590 = vpack.c.b16 %v478, %v476
    %v591 = vpack.c.b16 %v481, %v479
    %v592 = vpack.c.b16 %v482, %v480
    %v593 = vpack.c.b16 %v485, %v483
    %v594 = vpack.c.b16 %v486, %v484
    %v595 = vpack.c.b16 %v489, %v487
    %v596 = vpack.c.b16 %v490, %v488
    %v597 = vpack.c.b16 %v493, %v491
    %v598 = vpack.c.b16 %v494, %v492
    %v599 = vpack.c.b16 %v497, %v495
    %v600 = vpack.c.b16 %v498, %v496
    %v601 = vpack.c.b16 %v501, %v499
    %v602 = vpack.c.b16 %v502, %v500
    %v603 = vpack.c.b16 %v505, %v503
    %v604 = vpack.c.b16 %v506, %v504
    %vm703 = vcmask 130048
    %v705 = vsel %vm703, %v206, 0
    %707 = vmatpush.bf16.msra.mxu0 %v521
    %708 = vmatpush.bf16.msra.mxu0 %v519
    %709 = vmatpush.bf16.msra.mxu0 %v517
    %710 = vmatpush.bf16.msra.mxu0 %v515
    %711 = vmatpush.bf16.msra.mxu0 %v513
    %712 = vmatpush.bf16.msra.mxu0 %v511
    %713 = vmatpush.bf16.msra.mxu0 %v509
    %714 = vmatpush.bf16.msra.mxu0 %v507
    %715 = vmatmul.bf16.gmra.mxu0 %v200
    %v716 = vpop.f32.mrf.mxu0
    %v717 = vadd.f32 %v174, %v716
    %v718 = vpop.f32.mrf.mxu0
    %v719 = vadd.f32 %v174, %v718
    %720 = vdwg.mxu0
    %721 = vmatpush.bf16.msra.mxu0 %v537
    %722 = vmatpush.bf16.msra.mxu0 %v535
    %723 = vmatpush.bf16.msra.mxu0 %v533
    %724 = vmatpush.bf16.msra.mxu0 %v531
    %725 = vmatpush.bf16.msra.mxu0 %v529
    %726 = vmatpush.bf16.msra.mxu0 %v527
    %727 = vmatpush.bf16.msra.mxu0 %v525
    %728 = vmatpush.bf16.msra.mxu0 %v523
    %729 = vmatmul.bf16.gmra.mxu0 %v201
    %v730 = vpop.f32.mrf.mxu0
    %v731 = vadd.f32 %v717, %v730
    %v732 = vpop.f32.mrf.mxu0
    %v733 = vadd.f32 %v719, %v732
    %734 = vdwg.mxu0
    %735 = vmatpush.bf16.msra.mxu0 %v553
    %736 = vmatpush.bf16.msra.mxu0 %v551
    %737 = vmatpush.bf16.msra.mxu0 %v549
    %738 = vmatpush.bf16.msra.mxu0 %v547
    %739 = vmatpush.bf16.msra.mxu0 %v545
    %740 = vmatpush.bf16.msra.mxu0 %v543
    %741 = vmatpush.bf16.msra.mxu0 %v541
    %742 = vmatpush.bf16.msra.mxu0 %v539
    %743 = vmatmul.bf16.gmra.mxu0 %v202
    %v744 = vpop.f32.mrf.mxu0
    %v745 = vadd.f32 %v731, %v744
    %v746 = vpop.f32.mrf.mxu0
    %v747 = vadd.f32 %v733, %v746
    %748 = vdwg.mxu0
    %749 = vmatpush.bf16.msra.mxu0 %v569
    %750 = vmatpush.bf16.msra.mxu0 %v567
    %751 = vmatpush.bf16.msra.mxu0 %v565
    %752 = vmatpush.bf16.msra.mxu0 %v563
    %753 = vmatpush.bf16.msra.mxu0 %v561
    %754 = vmatpush.bf16.msra.mxu0 %v559
    %755 = vmatpush.bf16.msra.mxu0 %v557
    %756 = vmatpush.bf16.msra.mxu0 %v555
    %757 = vmatmul.bf16.gmra.mxu0 %v203
    %v758 = vpop.f32.mrf.mxu0
    %v759 = vadd.f32 %v745, %v758
    %v760 = vpop.f32.mrf.mxu0
    %v761 = vadd.f32 %v747, %v760
    %762 = vdwg.mxu0
    %763 = vmatpush.bf16.msra.mxu0 %v585
    %764 = vmatpush.bf16.msra.mxu0 %v583
    %765 = vmatpush.bf16.msra.mxu0 %v581
    %766 = vmatpush.bf16.msra.mxu0 %v579
    %767 = vmatpush.bf16.msra.mxu0 %v577
    %768 = vmatpush.bf16.msra.mxu0 %v575
    %769 = vmatpush.bf16.msra.mxu0 %v573
    %770 = vmatpush.bf16.msra.mxu0 %v571
    %771 = vmatmul.bf16.gmra.mxu0 %v204
    %v772 = vpop.f32.mrf.mxu0
    %v773 = vadd.f32 %v759, %v772
    %v774 = vpop.f32.mrf.mxu0
    %v775 = vadd.f32 %v761, %v774
    %776 = vdwg.mxu0
    %777 = vmatpush.bf16.msra.mxu0 %v601
    %778 = vmatpush.bf16.msra.mxu0 %v599
    %779 = vmatpush.bf16.msra.mxu0 %v597
    %780 = vmatpush.bf16.msra.mxu0 %v595
    %781 = vmatpush.bf16.msra.mxu0 %v593
    %782 = vmatpush.bf16.msra.mxu0 %v591
    %783 = vmatpush.bf16.msra.mxu0 %v589
    %784 = vmatpush.bf16.msra.mxu0 %v587
    %785 = vmatmul.bf16.gmra.mxu0 %v205
    %v786 = vpop.f32.mrf.mxu0
    %v787 = vadd.f32 %v773, %v786
    %v788 = vpop.f32.mrf.mxu0
    %v789 = vadd.f32 %v775, %v788
    %790 = vdwg.mxu0
    %791 = vmatpush.bf16.msra.mxu0 0
    %792 = vmatpush.bf16.msra.mxu0 0
    %793 = vmatpush.bf16.msra.mxu0 0
    %794 = vmatpush.bf16.msra.mxu0 0
    %795 = vmatpush.bf16.msra.mxu0 0
    %796 = vmatpush.bf16.msra.mxu0 0
    %797 = vmatpush.bf16.msra.mxu0 0
    %798 = vmatpush.bf16.msra.mxu0 %v603
    %799 = vmatmul.bf16.gmra.mxu0 %v705
    %v800 = vpop.f32.mrf.mxu0
    %v801 = vadd.f32 %v787, %v800
    %v802 = vpop.f32.mrf.mxu0
    %v803 = vadd.f32 %v789, %v802
    %804 = vdwg.mxu0
    %805 = vmatpush.bf16.msra.mxu0 %v522
    %806 = vmatpush.bf16.msra.mxu0 %v520
    %807 = vmatpush.bf16.msra.mxu0 %v518
    %808 = vmatpush.bf16.msra.mxu0 %v516
    %809 = vmatpush.bf16.msra.mxu0 %v514
    %810 = vmatpush.bf16.msra.mxu0 %v512
    %811 = vmatpush.bf16.msra.mxu0 %v510
    %812 = vmatpush.bf16.msra.mxu0 %v508
    %813 = vmatmul.bf16.gmra.mxu0 %v200
    %v814 = vpop.f32.mrf.mxu0
    %v815 = vadd.f32 %v175, %v814
    %v816 = vpop.f32.mrf.mxu0
    %v817 = vadd.f32 %v175, %v816
    %818 = vdwg.mxu0
    %819 = vmatpush.bf16.msra.mxu0 %v538
    %820 = vmatpush.bf16.msra.mxu0 %v536
    %821 = vmatpush.bf16.msra.mxu0 %v534
    %822 = vmatpush.bf16.msra.mxu0 %v532
    %823 = vmatpush.bf16.msra.mxu0 %v530
    %824 = vmatpush.bf16.msra.mxu0 %v528
    %825 = vmatpush.bf16.msra.mxu0 %v526
    %826 = vmatpush.bf16.msra.mxu0 %v524
    %827 = vmatmul.bf16.gmra.mxu0 %v201
    %v828 = vpop.f32.mrf.mxu0
    %v829 = vadd.f32 %v815, %v828
    %v830 = vpop.f32.mrf.mxu0
    %v831 = vadd.f32 %v817, %v830
    %832 = vdwg.mxu0
    %833 = vmatpush.bf16.msra.mxu0 %v554
    %834 = vmatpush.bf16.msra.mxu0 %v552
    %835 = vmatpush.bf16.msra.mxu0 %v550
    %836 = vmatpush.bf16.msra.mxu0 %v548
    %837 = vmatpush.bf16.msra.mxu0 %v546
    %838 = vmatpush.bf16.msra.mxu0 %v544
    %839 = vmatpush.bf16.msra.mxu0 %v542
    %840 = vmatpush.bf16.msra.mxu0 %v540
    %841 = vmatmul.bf16.gmra.mxu0 %v202
    %v842 = vpop.f32.mrf.mxu0
    %v843 = vadd.f32 %v829, %v842
    %v844 = vpop.f32.mrf.mxu0
    %v845 = vadd.f32 %v831, %v844
    %846 = vdwg.mxu0
    %847 = vmatpush.bf16.msra.mxu0 %v570
    %848 = vmatpush.bf16.msra.mxu0 %v568
    %849 = vmatpush.bf16.msra.mxu0 %v566
    %850 = vmatpush.bf16.msra.mxu0 %v564
    %851 = vmatpush.bf16.msra.mxu0 %v562
    %852 = vmatpush.bf16.msra.mxu0 %v560
    %853 = vmatpush.bf16.msra.mxu0 %v558
    %854 = vmatpush.bf16.msra.mxu0 %v556
    %855 = vmatmul.bf16.gmra.mxu0 %v203
    %v856 = vpop.f32.mrf.mxu0
    %v857 = vadd.f32 %v843, %v856
    %v858 = vpop.f32.mrf.mxu0
    %v859 = vadd.f32 %v845, %v858
    %860 = vdwg.mxu0
    %861 = vmatpush.bf16.msra.mxu0 %v586
    %862 = vmatpush.bf16.msra.mxu0 %v584
    %863 = vmatpush.bf16.msra.mxu0 %v582
    %864 = vmatpush.bf16.msra.mxu0 %v580
    %865 = vmatpush.bf16.msra.mxu0 %v578
    %866 = vmatpush.bf16.msra.mxu0 %v576
    %867 = vmatpush.bf16.msra.mxu0 %v574
    %868 = vmatpush.bf16.msra.mxu0 %v572
    %869 = vmatmul.bf16.gmra.mxu0 %v204
    %v870 = vpop.f32.mrf.mxu0
    %v871 = vadd.f32 %v857, %v870
    %v872 = vpop.f32.mrf.mxu0
    %v873 = vadd.f32 %v859, %v872
    %874 = vdwg.mxu0
    %875 = vmatpush.bf16.msra.mxu0 %v602
    %876 = vmatpush.bf16.msra.mxu0 %v600
    %877 = vmatpush.bf16.msra.mxu0 %v598
    %878 = vmatpush.bf16.msra.mxu0 %v596
    %879 = vmatpush.bf16.msra.mxu0 %v594
    %880 = vmatpush.bf16.msra.mxu0 %v592
    %881 = vmatpush.bf16.msra.mxu0 %v590
    %882 = vmatpush.bf16.msra.mxu0 %v588
    %883 = vmatmul.bf16.gmra.mxu0 %v205
    %v884 = vpop.f32.mrf.mxu0
    %v885 = vadd.f32 %v871, %v884
    %v886 = vpop.f32.mrf.mxu0
    %v887 = vadd.f32 %v873, %v886
    %888 = vdwg.mxu0
    %889 = vmatpush.bf16.msra.mxu0 0
    %890 = vmatpush.bf16.msra.mxu0 0
    %891 = vmatpush.bf16.msra.mxu0 0
    %892 = vmatpush.bf16.msra.mxu0 0
    %893 = vmatpush.bf16.msra.mxu0 0
    %894 = vmatpush.bf16.msra.mxu0 0
    %895 = vmatpush.bf16.msra.mxu0 0
    %896 = vmatpush.bf16.msra.mxu0 %v604
    %897 = vmatmul.bf16.gmra.mxu0 %v705
    %v898 = vpop.f32.mrf.mxu0
    %v899 = vadd.f32 %v885, %v898
    %v900 = vpop.f32.mrf.mxu0
    %v901 = vadd.f32 %v887, %v900
    %902 = vdwg.mxu0
    %v903 = vmax.f32 %v801, 0.0
    %v904 = vmax.f32 %v899, 0.0
    %v905 = vmax.f32 %v803, 0.0
    %v906 = vmax.f32 %v901, 0.0
    %v907 = vpack.c.bf16 %v905, %v903
    %v908 = vpack.c.bf16 %v906, %v904
    %v909 = vld [vmem:[%s3] sm:$0xf]
    %v910 = vld [vmem:[%s3 + $0x4] sm:$0xf]
    %v911 = vld [vmem:[%s3 + $0x8] sm:$0xf]
    %v912 = vld [vmem:[%s3 + $0xc] sm:$0xf]
    %v913 = vld [vmem:[%s3 + $0x10] sm:$0xf]
    %v914 = vld [vmem:[%s3 + $0x14] sm:$0xf]
    %v915 = vld [vmem:[%s3 + $0x18] sm:$0xf]
    %v916 = vld [vmem:[%s3 + $0x1c] sm:$0xf]
    %v917 = vld [vmem:[%s3 + $0x20] sm:$0xf]
    %v918 = vld [vmem:[%s3 + $0x24] sm:$0xf]
    %v919 = vld [vmem:[%s3 + $0x28] sm:$0xf]
    %v920 = vld [vmem:[%s3 + $0x2c] sm:$0xf]
    %v921 = vld [vmem:[%s3 + $0x30] sm:$0xf]
    %v922 = vld [vmem:[%s3 + $0x34] sm:$0xf]
    %v923 = vld [vmem:[%s3 + $0x38] sm:$0xf]
    %v924 = vld [vmem:[%s3 + $0x3c] sm:$0xf]
    %v925 = vld [vmem:[%s3 + $0x40] sm:$0xf]
    %v926 = vld [vmem:[%s3 + $0x44] sm:$0xf]
    %v927 = vld [vmem:[%s3 + $0x48] sm:$0xf]
    %v928 = vld [vmem:[%s3 + $0x4c] sm:$0xf]
    %v929 = vld [vmem:[%s3 + $0x50] sm:$0xf]
    %v930 = vld [vmem:[%s3 + $0x54] sm:$0xf]
    %v931 = vld [vmem:[%s3 + $0x58] sm:$0xf]
    %v932 = vld [vmem:[%s3 + $0x5c] sm:$0xf]
    %v933 = vld [vmem:[%s3 + $0x60] sm:$0xf]
    %v934 = vld [vmem:[%s3 + $0x64] sm:$0xf]
    %v935 = vld [vmem:[%s3 + $0x68] sm:$0xf]
    %v936 = vld [vmem:[%s3 + $0x6c] sm:$0xf]
    %v937 = vld [vmem:[%s3 + $0x70] sm:$0xf]
    %v938 = vld [vmem:[%s3 + $0x74] sm:$0xf]
    %v939 = vld [vmem:[%s3 + $0x78] sm:$0xf]
    %v940 = vld [vmem:[%s3 + $0x7c] sm:$0xf]
    %v941 = vld [vmem:[%s4] sm:$0x1]
    %v943 = vperm.slane %v941, 0
    %v977 = vunpack.c.l.b16 %v909
    %v978 = vunpack.c.l.b16 %v910
    %v979 = vunpack.c.l.b16 %v911
    %v980 = vunpack.c.l.b16 %v912
    %v981 = vunpack.c.l.b16 %v913
    %v982 = vunpack.c.l.b16 %v914
    %v983 = vunpack.c.l.b16 %v915
    %v984 = vunpack.c.l.b16 %v916
    %v985 = vunpack.c.l.b16 %v917
    %v986 = vunpack.c.l.b16 %v918
    %v987 = vunpack.c.l.b16 %v919
    %v988 = vunpack.c.l.b16 %v920
    %v989 = vunpack.c.l.b16 %v921
    %v990 = vunpack.c.l.b16 %v922
    %v991 = vunpack.c.l.b16 %v923
    %v992 = vunpack.c.l.b16 %v924
    %v993 = vunpack.c.l.b16 %v925
    %v994 = vunpack.c.l.b16 %v926
    %v995 = vunpack.c.l.b16 %v927
    %v996 = vunpack.c.l.b16 %v928
    %v997 = vunpack.c.l.b16 %v929
    %v998 = vunpack.c.l.b16 %v930
    %v999 = vunpack.c.l.b16 %v931
    %v1000 = vunpack.c.l.b16 %v932
    %v1001 = vunpack.c.l.b16 %v933
    %v1002 = vunpack.c.l.b16 %v934
    %v1003 = vunpack.c.l.b16 %v935
    %v1004 = vunpack.c.l.b16 %v936
    %v1005 = vunpack.c.l.b16 %v937
    %v1006 = vunpack.c.l.b16 %v938
    %v1007 = vunpack.c.l.b16 %v939
    %v1008 = vunpack.c.l.b16 %v940
    %v1009 = vpack.c.b16 %v978, %v977
    %v1010 = vpack.c.b16 %v980, %v979
    %v1011 = vpack.c.b16 %v982, %v981
    %v1012 = vpack.c.b16 %v984, %v983
    %v1013 = vpack.c.b16 %v986, %v985
    %v1014 = vpack.c.b16 %v988, %v987
    %v1015 = vpack.c.b16 %v990, %v989
    %v1016 = vpack.c.b16 %v992, %v991
    %v1017 = vpack.c.b16 %v994, %v993
    %v1018 = vpack.c.b16 %v996, %v995
    %v1019 = vpack.c.b16 %v998, %v997
    %v1020 = vpack.c.b16 %v1000, %v999
    %v1021 = vpack.c.b16 %v1002, %v1001
    %v1022 = vpack.c.b16 %v1004, %v1003
    %v1023 = vpack.c.b16 %v1006, %v1005
    %v1024 = vpack.c.b16 %v1008, %v1007
    %1041 = vmatpush.bf16.msra.mxu0 %v1016
    %1042 = vmatpush.bf16.msra.mxu0 %v1015
    %1043 = vmatpush.bf16.msra.mxu0 %v1014
    %1044 = vmatpush.bf16.msra.mxu0 %v1013
    %1045 = vmatpush.bf16.msra.mxu0 %v1012
    %1046 = vmatpush.bf16.msra.mxu0 %v1011
    %1047 = vmatpush.bf16.msra.mxu0 %v1010
    %1048 = vmatpush.bf16.msra.mxu0 %v1009
    %1049 = vmatmul.bf16.gmra.mxu0 %v907
    %v1050 = vpop.f32.mrf.mxu0
    %v1051 = vadd.f32 %v943, %v1050
    %v1052 = vpop.f32.mrf.mxu0
    %v1053 = vadd.f32 %v943, %v1052
    %1054 = vdwg.mxu0
    %1055 = vmatpush.bf16.msra.mxu0 %v1024
    %1056 = vmatpush.bf16.msra.mxu0 %v1023
    %1057 = vmatpush.bf16.msra.mxu0 %v1022
    %1058 = vmatpush.bf16.msra.mxu0 %v1021
    %1059 = vmatpush.bf16.msra.mxu0 %v1020
    %1060 = vmatpush.bf16.msra.mxu0 %v1019
    %1061 = vmatpush.bf16.msra.mxu0 %v1018
    %1062 = vmatpush.bf16.msra.mxu0 %v1017
    %1063 = vmatmul.bf16.gmra.mxu0 %v908
    %v1064 = vpop.f32.mrf.mxu0
    %v1065 = vadd.f32 %v1051, %v1064
    %v1066 = vpop.f32.mrf.mxu0
    %v1067 = vadd.f32 %v1053, %v1066
    %1068 = vdwg.mxu0
    %v1069 = vmax.f32 %v1065, 0.0
    %v1070 = vmax.f32 %v1067, 0.0
    %v1071 = vpack.c.bf16 %v1070, %v1069
    %v1072 = vld [vmem:[%s5] sm:$0xf]
    %v1073 = vld [vmem:[%s5 + $0x4] sm:$0xf]
    %v1074 = vld [vmem:[%s5 + $0x8] sm:$0xf]
    %v1075 = vld [vmem:[%s5 + $0xc] sm:$0xf]
    %v1076 = vld [vmem:[%s5 + $0x10] sm:$0xf]
    %v1077 = vld [vmem:[%s5 + $0x14] sm:$0xf]
    %v1078 = vld [vmem:[%s5 + $0x18] sm:$0xf]
    %v1079 = vld [vmem:[%s5 + $0x1c] sm:$0xf]
    %v1080 = vld [vmem:[%s5 + $0x20] sm:$0xf]
    %v1081 = vld [vmem:[%s5 + $0x24] sm:$0xf]
    %v1082 = vld [vmem:[%s5 + $0x28] sm:$0xf]
    %v1083 = vld [vmem:[%s5 + $0x2c] sm:$0xf]
    %v1084 = vld [vmem:[%s5 + $0x30] sm:$0xf]
    %v1085 = vld [vmem:[%s5 + $0x34] sm:$0xf]
    %v1086 = vld [vmem:[%s5 + $0x38] sm:$0xf]
    %v1087 = vld [vmem:[%s5 + $0x3c] sm:$0xf]
    %v1088 = vld [vmem:[%s6] sm:$0x1]
    %v1090 = vperm.slane %v1088, 0
    %v1108 = vunpack.c.l.b16 %v1072
    %v1109 = vunpack.c.l.b16 %v1073
    %v1110 = vunpack.c.l.b16 %v1074
    %v1111 = vunpack.c.l.b16 %v1075
    %v1112 = vunpack.c.l.b16 %v1076
    %v1113 = vunpack.c.l.b16 %v1077
    %v1114 = vunpack.c.l.b16 %v1078
    %v1115 = vunpack.c.l.b16 %v1079
    %v1116 = vunpack.c.l.b16 %v1080
    %v1117 = vunpack.c.l.b16 %v1081
    %v1118 = vunpack.c.l.b16 %v1082
    %v1119 = vunpack.c.l.b16 %v1083
    %v1120 = vunpack.c.l.b16 %v1084
    %v1121 = vunpack.c.l.b16 %v1085
    %v1122 = vunpack.c.l.b16 %v1086
    %v1123 = vunpack.c.l.b16 %v1087
    %v1124 = vpack.c.b16 %v1109, %v1108
    %v1125 = vpack.c.b16 %v1111, %v1110
    %v1126 = vpack.c.b16 %v1113, %v1112
    %v1127 = vpack.c.b16 %v1115, %v1114
    %v1128 = vpack.c.b16 %v1117, %v1116
    %v1129 = vpack.c.b16 %v1119, %v1118
    %v1130 = vpack.c.b16 %v1121, %v1120
    %v1131 = vpack.c.b16 %v1123, %v1122
    %1140 = vmatpush.bf16.msra.mxu0 %v1131
    %1141 = vmatpush.bf16.msra.mxu0 %v1130
    %1142 = vmatpush.bf16.msra.mxu0 %v1129
    %1143 = vmatpush.bf16.msra.mxu0 %v1128
    %1144 = vmatpush.bf16.msra.mxu0 %v1127
    %1145 = vmatpush.bf16.msra.mxu0 %v1126
    %1146 = vmatpush.bf16.msra.mxu0 %v1125
    %1147 = vmatpush.bf16.msra.mxu0 %v1124
    %1148 = vmatmul.bf16.gmra.mxu0 %v1071
    %v1149 = vpop.f32.mrf.mxu0
    %v1150 = vadd.f32 %v1090, %v1149
    %v1151 = vpop.f32.mrf.mxu0
    %v1152 = vadd.f32 %v1090, %v1151
    %1153 = vdwg.mxu0
    %v1154 = vmax.f32 %v1150, 0.0
    %v1155 = vmax.f32 %v1152, 0.0
    %v1156 = vpack.c.bf16 %v1155, %v1154
    %v1157 = vld [vmem:[%s7] sm:$0xf]
    %v1158 = vld [vmem:[%s7 + $0x4] sm:$0xf]
    %v1159 = vld [vmem:[%s7 + $0x8] sm:$0xf]
    %v1160 = vld [vmem:[%s7 + $0xc] sm:$0xf]
    %v1161 = vld [vmem:[%s7 + $0x10] sm:$0xf]
    %v1162 = vld [vmem:[%s7 + $0x14] sm:$0xf]
    %v1163 = vld [vmem:[%s7 + $0x18] sm:$0xf]
    %v1164 = vld [vmem:[%s7 + $0x1c] sm:$0xf]
    %v1165 = vld [vmem:[%s8] sm:$0x1]
    %v1167 = vperm.slane %v1165, 0
    %v1177 = vunpack.c.l.b16 %v1157
    %v1178 = vunpack.c.l.b16 %v1158
    %v1179 = vunpack.c.l.b16 %v1159
    %v1180 = vunpack.c.l.b16 %v1160
    %v1181 = vunpack.c.l.b16 %v1161
    %v1182 = vunpack.c.l.b16 %v1162
    %v1183 = vunpack.c.l.b16 %v1163
    %v1184 = vunpack.c.l.b16 %v1164
    %v1185 = vpack.c.b16 %v1178, %v1177
    %v1186 = vpack.c.b16 %v1180, %v1179
    %v1187 = vpack.c.b16 %v1182, %v1181
    %v1188 = vpack.c.b16 %v1184, %v1183
    %vm1193 = vcmask 523264
    %v1195 = vsel %vm1193, %v1156, 0
    %1197 = vmatpush.bf16.msra.mxu0 0
    %1198 = vmatpush.bf16.msra.mxu0 0
    %1199 = vmatpush.bf16.msra.mxu0 0
    %1200 = vmatpush.bf16.msra.mxu0 0
    %1201 = vmatpush.bf16.msra.mxu0 %v1188
    %1202 = vmatpush.bf16.msra.mxu0 %v1187
    %1203 = vmatpush.bf16.msra.mxu0 %v1186
    %1204 = vmatpush.bf16.msra.mxu0 %v1185
    %1205 = vmatmul.bf16.gmra.mxu0 %v1195
    %v1206 = vpop.f32.mrf.mxu0
    %v1207 = vadd.f32 %v1167, %v1206
    %v1208 = vpop.f32.mrf.mxu0
    %v1209 = vadd.f32 %v1167, %v1208
    %1210 = vdwg.mxu0
    %vm1211 = vcmask 80896
    %v1212 = vsel %vm1211, %v1207, -inf
    %1213 = vmax.xlane.f32.xlu0 %v1212
    %v1214 = vpop.xlane.xlu0 %1213
    %v1215 = vsel %vm1211, %v1209, -inf
    %1216 = vmax.xlane.f32.xlu0 %v1215
    %v1217 = vpop.xlane.xlu0 %1216
    %v1218 = vsub.f32 %v1207, %v1214
    %v1219 = vsub.f32 %v1209, %v1217
    %v1220 = vmul.f32 %v1218, 1.442695
    %v1221 = vpow.pop %v1220
    %v1222 = vmul.f32 %v1219, 1.442695
    %v1223 = vpow.pop %v1222
    %v1224 = vsel %vm1211, %v1221, 0.0
    %1225 = vadd.xlane.f32.xlu0 %v1224
    %v1226 = vpop.xlane.xlu0 %1225
    %v1227 = vsel %vm1211, %v1223, 0.0
    %1228 = vadd.xlane.f32.xlu0 %v1227
    %v1229 = vpop.xlane.xlu0 %1228
    %v1230 = vlog2.pop %v1226
    %v1231 = vmul.f32 %v1230, 0.6931472
    %v1232 = vlog2.pop %v1229
    %v1233 = vmul.f32 %v1232, 0.6931472
    %v1234 = vsub.f32 %v1218, %v1231
    %v1235 = vsub.f32 %v1219, %v1233
    %1236 = vst.msk [vmem:[#allocation7] sm:$0xff] %vm1211, %v1234
    %1237 = vst.msk [vmem:[#allocation7 + $0x8] sm:$0xff] %vm1211, %v1235
    // Predicated region
    $region46: #{tpu_custom_call.1} parent=1 // pred_check
      _
    $region47: #{tpu_custom_call.1} parent=1 // pred_check_branch
      %1239 = sbr.rel (0) target = $region49
    $region48: #{tpu_custom_call.1} parent=1 // pred_region
      %1241 = vsyncadd [#allocation4], 0
      %s1242 = sshll.u32 [#allocation7], 4
      %s1243 = int_to_ptr.vmem [resolvable:$true] %s1242
      %s1244 = sshll.u32 %s9, 4
      %s1245 = int_to_ptr.hbm [resolvable:$true] %s1244
      %1250 = dma.vmem_to_hbm [thread:$0]  %s1243, 256, %s1245, [#allocation4], 128, 128, 8
    $region49: #{tpu_custom_call.1} parent=1 // pred_fallthru
      _
    // Predicated region
    $region50: #{tpu_custom_call.1} parent=1 // pred_check
      _
    $region51: #{tpu_custom_call.1} parent=1 // pred_check_branch
      %1252 = sbr.rel (0) target = $region53
    $region52: #{tpu_custom_call.1} parent=1 // pred_region
      %1254 = dma.done [#allocation4], 256
    $region53: #{tpu_custom_call.1} parent=1 // pred_fallthru
      _
    %1255 = vsyncpa [#allocation3], 1
    %1256 = vsyncpa [#allocation6], 1
    %1257 = vsyncpa [#allocation4], 1

</llo_original>
